<compile_context>
chip_gen: v5e
topology: v5e:2x2
jax: 0.10.0
libtpu: 0.0.40
codegen_flags: <defaults>
</compile_context>

<pallas_src>
from functools import partial

import jax
import jax.numpy as jnp
from jax.experimental import pallas as pl
from jax.experimental.pallas import tpu as pltpu


# --------------------------------------------------------------------------- #
# Pallas kernel
# --------------------------------------------------------------------------- #
def _precond_kernel(l_ref, d_ref, p_ref, *, kind):
    # Blocks are (2, BB, N, N); plane 0 = real, plane 1 = imag.
    Lr, Li = l_ref[0], l_ref[1]
    Dr, Di = d_ref[0], d_ref[1]
    f32 = jnp.float32

    def bmm(a, b):
        # batched a @ b  (standard MXU matmul)
        return jnp.einsum('bij,bjk->bik', a, b, preferred_element_type=f32)

    def bmm_rT(a, b):
        # batched a @ b^T  (MXU consumes the transposed operand directly;
        # no XLU transpose, no extra VMEM copy)
        return jnp.einsum('bij,bkj->bik', a, b, preferred_element_type=f32)

    if kind == 'LLDD':
        # P = L @ (L^H @ DD) == (L @ L^H) @ DD.
        # A = L @ L^H via 3-mult Gauss with the conjugation sign folded in:
        #   Ar = Lr Lr^T + Li Li^T ;  Ai = Li Lr^T - Lr Li^T
        t1 = bmm_rT(Lr, Lr)
        t2 = bmm_rT(Li, Li)
        t3 = bmm_rT(Lr + Li, Lr - Li)
        Ar = t1 + t2
        Ai = t3 - t1 + t2
        Br, Bi = Dr, Di
    elif kind == 'LAL':
        # P = L @ (DD @ L^H).
        # M = DD @ L^H via 3-mult Gauss with the conjugation folded in:
        #   Mr = Dr Lr^T + Di Li^T ;  Mi = Di Lr^T - Dr Li^T
        t1 = bmm_rT(Dr, Lr)
        t2 = bmm_rT(Di, Li)
        t3 = bmm_rT(Dr + Di, Lr - Li)
        Ar, Ai = Lr, Li
        Br = t1 + t2
        Bi = t3 - t1 + t2
    else:
        raise ValueError(f'kind {kind} not found')

    # P = A @ B (standard complex product, 3-mult Gauss).
    s1 = bmm(Ar, Br)
    s2 = bmm(Ai, Bi)
    s3 = bmm(Ar + Ai, Br + Bi)
    p_ref[0] = s1 - s2
    p_ref[1] = s3 - s1 - s2


# --------------------------------------------------------------------------- #
# Wrapper
# --------------------------------------------------------------------------- #
def _as_batched(x):
    """Match torch's .squeeze() but never drop the batch dim to 2-D."""
    x = jnp.squeeze(x)
    if x.ndim == 2:          # B == 1 edge case: re-add the batch dim
        x = x[None]
    assert x.ndim == 3 and x.shape[-1] == x.shape[-2], (
        "expected batched square matrices after squeeze")
    return x


def _choose_block_batch(B, N, vmem_budget_bytes=28 * 1024 * 1024):
    # Per batch element: 3 packed streams x 2 pipeline buffers (6 x 2 planes)
    # + ~10 live f32 intermediates  ->  ~88 * N^2 bytes.
    bytes_per_batch = (6 * 2 + 10) * 4 * N * N
    bb = max(1, vmem_budget_bytes // max(bytes_per_batch, 1))
    return int(min(B, 8, bb))


def precond_opt_pallas(DD, L, *, kind='LLDD', block_batch=None,
                       input_dtype=jnp.float32):
    """Batched complex preconditioner product computed in a Pallas kernel.

    DD, L: complex arrays whose squeeze gives (B, N, N). Returns complex64
    (B, N, N) matching the PyTorch module's precond_opt.
    """
    L3 = _as_batched(L)
    D3 = _as_batched(DD)
    assert L3.shape == D3.shape
    B, N, _ = L3.shape

    # Pack real/imag planes -> one array per operand: (2, B, N, N).
    Lp = jnp.stack([jnp.real(L3), jnp.imag(L3)]).astype(input_dtype)
    Dp = jnp.stack([jnp.real(D3), jnp.imag(D3)]).astype(input_dtype)

    bb = block_batch if block_batch is not None else _choose_block_batch(B, N)

    # Pad the batch so the grid tiles it exactly; padded rows give P = 0 and
    # are sliced off before returning.
    B_pad = ((B + bb - 1) // bb) * bb
    if B_pad != B:
        pad = [(0, 0), (0, B_pad - B), (0, 0), (0, 0)]
        Lp = jnp.pad(Lp, pad)
        Dp = jnp.pad(Dp, pad)

    grid = (B_pad // bb,)
    spec = pl.BlockSpec((2, bb, N, N), lambda g: (0, g, 0, 0))

    itemsize = jnp.dtype(input_dtype).itemsize
    cost = pl.CostEstimate(
        flops=int(B_pad) * 6 * 2 * N ** 3,          # 6 real matmuls / element
        transcendentals=0,
        bytes_accessed=(2 * 2 * int(B_pad) * N * N * itemsize   # L, DD in
                        + 2 * int(B_pad) * N * N * 4),          # P out (f32)
    )

    Pp = pl.pallas_call(
        partial(_precond_kernel, kind=kind),
        grid=grid,
        in_specs=[spec, spec],
        out_specs=spec,
        out_shape=jax.ShapeDtypeStruct((2, B_pad, N, N), jnp.float32),
        compiler_params=pltpu.CompilerParams(
            dimension_semantics=("parallel",),
            vmem_limit_bytes=48 * 1024 * 1024,
        ),
        cost_estimate=cost,
    )(Lp, Dp)
    # TODO(synk): for very large N (>~768) add a second grid axis tiling the
    # DD/P columns so the working set fits v7x's 64 MiB VMEM.

    P = (Pp[0] + 1j * Pp[1]).astype(jnp.complex64)
    return P[:B]


def conv_complex_loss(DD, L, *, kind='LLDD'):
    P = precond_opt_pallas(DD, L, kind=kind)
    # TODO(synk): the SVD-based condition number (torch.linalg.cond, p=2) has
    # no Pallas TPU equivalent; computed with plain JAX/XLA.
    s = jnp.linalg.svd(P, compute_uv=False)
    cond = s[..., 0] / s[..., -1]
    return jnp.mean(cond)


# --------------------------------------------------------------------------- #
# Self-test
# --------------------------------------------------------------------------- #
if __name__ == "__main__":
    key = jax.random.PRNGKey(0)
    B, N = 2, 16
    k1, k2, k3, k4 = jax.random.split(key, 4)

    # Inputs shaped (B, 1, N, N) so the module's .squeeze() is exercised.
    eye = jnp.eye(N, dtype=jnp.float32)[None, None]
    L = (eye
         + 0.1 * jax.random.normal(k1, (B, 1, N, N), dtype=jnp.float32)
         + 1j * 0.1 * jax.random.normal(k2, (B, 1, N, N), dtype=jnp.float32)
         ).astype(jnp.complex64)
    DD = (eye
          + 0.1 * jax.random.normal(k3, (B, 1, N, N), dtype=jnp.float32)
          + 1j * 0.1 * jax.random.normal(k4, (B, 1, N, N), dtype=jnp.float32)
          ).astype(jnp.complex64)

    loss = conv_complex_loss(DD, L, kind="LLDD")
    jax.block_until_ready(loss)

    # Sanity check of the Pallas matmul chain against plain JAX (both kinds).
    Ls, Ds = jnp.squeeze(L), jnp.squeeze(DD)
    LH = jnp.conj(jnp.swapaxes(Ls, -2, -1))

    P_pallas = precond_opt_pallas(DD, L, kind="LLDD")
    P_ref = jnp.einsum("bij,bjk->bik", Ls,
                       jnp.einsum("bij,bjk->bik", LH, Ds))
    assert jnp.allclose(P_pallas, P_ref, atol=1e-4, rtol=1e-4)

    P_pallas_lal = precond_opt_pallas(DD, L, kind="LAL")
    P_ref_lal = jnp.einsum("bij,bjk->bik", Ls,
                           jnp.einsum("bij,bjk->bik", Ds, LH))
    assert jnp.allclose(P_pallas_lal, P_ref_lal, atol=1e-4, rtol=1e-4)

    assert jnp.isfinite(loss)
    print("KERNEL_OK")
</pallas_src>

<mosaic_0001>
module attributes {stable_mosaic.version = 11 : i64} {
  func.func @_precond_kernel(%arg0: i32, %arg1: memref<2x2x16x16xf32, #tpu.memory_space<vmem>>, %arg2: memref<2x2x16x16xf32, #tpu.memory_space<vmem>>, %arg3: memref<2x2x16x16xf32, #tpu.memory_space<vmem>>) attributes {dimension_semantics = [#tpu.dimension_semantics<parallel>], iteration_bounds = array<i64: 1>, scalar_prefetch = 0 : i64, scratch_operands = 0 : i64, tpu.core_type = #tpu.core_type<tc>, window_params = [{transform_indices = @transform_0, window_bounds = array<i64: 2, 2, 16, 16>}, {transform_indices = @transform_1, window_bounds = array<i64: 2, 2, 16, 16>}, {transform_indices = @transform_2, window_bounds = array<i64: 2, 2, 16, 16>}]} {
    %c0 = arith.constant 0 : index
    %c0_0 = arith.constant 0 : index
    %c0_1 = arith.constant 0 : index
    %c0_2 = arith.constant 0 : index
    %0 = vector.load %arg1[%c0, %c0_0, %c0_1, %c0_2] : memref<2x2x16x16xf32, #tpu.memory_space<vmem>>, vector<1x2x16x16xf32>
    %1 = vector.shape_cast %0 : vector<1x2x16x16xf32> to vector<2x16x16xf32>
    %c1 = arith.constant 1 : index
    %c0_3 = arith.constant 0 : index
    %c0_4 = arith.constant 0 : index
    %c0_5 = arith.constant 0 : index
    %2 = vector.load %arg1[%c1, %c0_3, %c0_4, %c0_5] : memref<2x2x16x16xf32, #tpu.memory_space<vmem>>, vector<1x2x16x16xf32>
    %3 = vector.shape_cast %2 : vector<1x2x16x16xf32> to vector<2x16x16xf32>
    %c0_6 = arith.constant 0 : index
    %c0_7 = arith.constant 0 : index
    %c0_8 = arith.constant 0 : index
    %c0_9 = arith.constant 0 : index
    %4 = vector.load %arg2[%c0_6, %c0_7, %c0_8, %c0_9] : memref<2x2x16x16xf32, #tpu.memory_space<vmem>>, vector<1x2x16x16xf32>
    %5 = vector.shape_cast %4 : vector<1x2x16x16xf32> to vector<2x16x16xf32>
    %c1_10 = arith.constant 1 : index
    %c0_11 = arith.constant 0 : index
    %c0_12 = arith.constant 0 : index
    %c0_13 = arith.constant 0 : index
    %6 = vector.load %arg2[%c1_10, %c0_11, %c0_12, %c0_13] : memref<2x2x16x16xf32, #tpu.memory_space<vmem>>, vector<1x2x16x16xf32>
    %7 = vector.shape_cast %6 : vector<1x2x16x16xf32> to vector<2x16x16xf32>
    "tpu.trace_start"() <{level = 10 : i32, message = "bij,bkj->bik"}> : () -> ()
    %cst = arith.constant dense<0.000000e+00> : vector<2x16x16xf32>
    %8 = tpu.matmul %1, %1, %cst {dimension_numbers = #tpu.dot_dimension_numbers<[2], [2], [1], [1], [0, 0, 0, 1, 1, 1], [0], [0]>} : vector<2x16x16xf32>, vector<2x16x16xf32>, vector<2x16x16xf32> -> vector<2x16x16xf32>
    %cst_14 = arith.constant dense<0.000000e+00> : vector<2x16x16xf32>
    %9 = tpu.matmul %3, %3, %cst_14 {dimension_numbers = #tpu.dot_dimension_numbers<[2], [2], [1], [1], [0, 0, 0, 1, 1, 1], [0], [0]>} : vector<2x16x16xf32>, vector<2x16x16xf32>, vector<2x16x16xf32> -> vector<2x16x16xf32>
    "tpu.trace_stop"() : () -> ()
    %10 = arith.addf %1, %3 : vector<2x16x16xf32>
    %11 = arith.subf %1, %3 : vector<2x16x16xf32>
    "tpu.trace_start"() <{level = 10 : i32, message = "bij,bkj->bik"}> : () -> ()
    %cst_15 = arith.constant dense<0.000000e+00> : vector<2x16x16xf32>
    %12 = tpu.matmul %10, %11, %cst_15 {dimension_numbers = #tpu.dot_dimension_numbers<[2], [2], [1], [1], [0, 0, 0, 1, 1, 1], [0], [0]>} : vector<2x16x16xf32>, vector<2x16x16xf32>, vector<2x16x16xf32> -> vector<2x16x16xf32>
    "tpu.trace_stop"() : () -> ()
    %13 = arith.addf %8, %9 : vector<2x16x16xf32>
    %14 = arith.subf %12, %8 : vector<2x16x16xf32>
    %15 = arith.addf %14, %9 : vector<2x16x16xf32>
    "tpu.trace_start"() <{level = 10 : i32, message = "bij,bjk->bik"}> : () -> ()
    %cst_16 = arith.constant dense<0.000000e+00> : vector<2x16x16xf32>
    %16 = tpu.matmul %13, %5, %cst_16 {dimension_numbers = #tpu.dot_dimension_numbers<[2], [1], [1], [2], [0, 0, 0, 1, 1, 2], [0], [0]>} : vector<2x16x16xf32>, vector<2x16x16xf32>, vector<2x16x16xf32> -> vector<2x16x16xf32>
    %cst_17 = arith.constant dense<0.000000e+00> : vector<2x16x16xf32>
    %17 = tpu.matmul %15, %7, %cst_17 {dimension_numbers = #tpu.dot_dimension_numbers<[2], [1], [1], [2], [0, 0, 0, 1, 1, 2], [0], [0]>} : vector<2x16x16xf32>, vector<2x16x16xf32>, vector<2x16x16xf32> -> vector<2x16x16xf32>
    "tpu.trace_stop"() : () -> ()
    %18 = arith.addf %13, %15 : vector<2x16x16xf32>
    %19 = arith.addf %5, %7 : vector<2x16x16xf32>
    "tpu.trace_start"() <{level = 10 : i32, message = "bij,bjk->bik"}> : () -> ()
    %cst_18 = arith.constant dense<0.000000e+00> : vector<2x16x16xf32>
    %20 = tpu.matmul %18, %19, %cst_18 {dimension_numbers = #tpu.dot_dimension_numbers<[2], [1], [1], [2], [0, 0, 0, 1, 1, 2], [0], [0]>} : vector<2x16x16xf32>, vector<2x16x16xf32>, vector<2x16x16xf32> -> vector<2x16x16xf32>
    "tpu.trace_stop"() : () -> ()
    %21 = arith.subf %16, %17 : vector<2x16x16xf32>
    %c0_19 = arith.constant 0 : index
    %c0_20 = arith.constant 0 : index
    %c0_21 = arith.constant 0 : index
    %c0_22 = arith.constant 0 : index
    %22 = vector.load %arg3[%c0_19, %c0_20, %c0_21, %c0_22] : memref<2x2x16x16xf32, #tpu.memory_space<vmem>>, vector<1x2x16x16xf32>
    %23 = vector.shape_cast %22 : vector<1x2x16x16xf32> to vector<2x16x16xf32>
    %24 = vector.shape_cast %21 : vector<2x16x16xf32> to vector<1x2x16x16xf32>
    tpu.vector_store %arg3[%c0_19, %c0_20, %c0_21, %c0_22], %24 {strides = array<i32>} : memref<2x2x16x16xf32, #tpu.memory_space<vmem>>, vector<1x2x16x16xf32>,
    %25 = arith.subf %20, %16 : vector<2x16x16xf32>
    %26 = arith.subf %25, %17 : vector<2x16x16xf32>
    %c1_23 = arith.constant 1 : index
    %c0_24 = arith.constant 0 : index
    %c0_25 = arith.constant 0 : index
    %c0_26 = arith.constant 0 : index
    %27 = vector.load %arg3[%c1_23, %c0_24, %c0_25, %c0_26] : memref<2x2x16x16xf32, #tpu.memory_space<vmem>>, vector<1x2x16x16xf32>
    %28 = vector.shape_cast %27 : vector<1x2x16x16xf32> to vector<2x16x16xf32>
    %29 = vector.shape_cast %26 : vector<2x16x16xf32> to vector<1x2x16x16xf32>
    tpu.vector_store %arg3[%c1_23, %c0_24, %c0_25, %c0_26], %29 {strides = array<i32>} : memref<2x2x16x16xf32, #tpu.memory_space<vmem>>, vector<1x2x16x16xf32>,
    return
  }
  func.func @transform_0(%arg0: i32) -> (i32, i32, i32, i32) {
    %c0_i32 = arith.constant 0 : i32
    %c0_i32_0 = arith.constant 0 : i32
    %c0_i32_1 = arith.constant 0 : i32
    %c0_i32_2 = arith.constant 0 : i32
    return %c0_i32, %arg0, %c0_i32_0, %c0_i32_1 : i32, i32, i32, i32
  }
  func.func @transform_1(%arg0: i32) -> (i32, i32, i32, i32) {
    %c0_i32 = arith.constant 0 : i32
    %c0_i32_0 = arith.constant 0 : i32
    %c0_i32_1 = arith.constant 0 : i32
    %c0_i32_2 = arith.constant 0 : i32
    return %c0_i32, %arg0, %c0_i32_0, %c0_i32_1 : i32, i32, i32, i32
  }
  func.func @transform_2(%arg0: i32) -> (i32, i32, i32, i32) {
    %c0_i32 = arith.constant 0 : i32
    %c0_i32_0 = arith.constant 0 : i32
    %c0_i32_1 = arith.constant 0 : i32
    %c0_i32_2 = arith.constant 0 : i32
    return %c0_i32, %arg0, %c0_i32_0, %c0_i32_1 : i32, i32, i32, i32
  }
}

</mosaic_0001>

<llo_original>
// kernel: tpu_custom_call.1
$region0: #{tpu_custom_call.1}
  #allocation0 [shape = 'u32[]', space=smem, size = 0x4, offset = 0x4, fixed_abs, tag = 'smem constant byte address 0x4 - core index']
  #allocation1 [shape = 'u32[72,128]{1,0:T(1,128)}', space=vmem, size = 0x9000, scoped, tag = 'internal scratch']
  %s0 = inlined_call_operand.hbm [shape: f32[2,2,16,16], index: 0, kind: input, shape index: {}]
  %s1 = inlined_call_operand.hbm [shape: f32[2,2,16,16], index: 1, kind: input, shape index: {}]
  %s2 = inlined_call_operand.hbm [shape: f32[2,2,16,16], index: 2, kind: output, shape index: {}]
  %s3 = sld [smem:[#allocation0]]
  $region26: #{tpu_custom_call.1} parent=0
    _
  %s5 = ssub.s32 1, %s3
  %s6 = scalar_select 0, %s5, %s3
  $region1: #{tpu_custom_call.1} parent=0
    #allocation2 [shape = 'u8[32768]{0}', space=vmem, size = 0x8000, scoped, tag = 'input window, operand 0, single buffered']
    #allocation3 [shape = 's32[1]{0}', space=sflag, size = 0x4, scoped, tag = 'scoped memory for tpu_custom_call.1']
    #allocation4 [shape = 's32[1]{0}', space=sflag, size = 0x4, scoped, tag = 'scoped memory for tpu_custom_call.1']
    #allocation5 [shape = 'u8[32768]{0}', space=vmem, size = 0x8000, scoped, tag = 'input window, operand 1, single buffered']
    #allocation6 [shape = 's32[1]{0}', space=sflag, size = 0x4, scoped, tag = 'scoped memory for tpu_custom_call.1']
    #allocation7 [shape = 'u8[32768]{0}', space=vmem, size = 0x8000, scoped, tag = 'output window, operand 0, single buffered']
    %7 = vsyncpa [#allocation3], 0
    %8 = vsyncpa [#allocation6], 0
    %9 = vsyncpa [#allocation4], 0
    // Predicated region
    $region2: #{tpu_custom_call.1} parent=1 // pred_check
      _
    $region3: #{tpu_custom_call.1} parent=1 // pred_check_branch
      %11 = sbr.rel (0) target = $region5
    $region4: #{tpu_custom_call.1} parent=1 // pred_region
      %13 = vsyncadd [#allocation3], 0
      %s14 = sshll.u32 %s0, 4
      %s15 = int_to_ptr.hbm [resolvable:$true] %s14
      %s16 = sshll.u32 [#allocation2], 4
      %s17 = int_to_ptr.vmem [resolvable:$true] %s16
      %22 = dma.hbm_to_vmem [thread:$0]  %s15, 1024, %s17, [#allocation3], 128, 128, 8
    $region5: #{tpu_custom_call.1} parent=1 // pred_fallthru
      _
    // Predicated region
    $region6: #{tpu_custom_call.1} parent=1 // pred_check
      _
    $region7: #{tpu_custom_call.1} parent=1 // pred_check_branch
      %24 = sbr.rel (0) target = $region9
    $region8: #{tpu_custom_call.1} parent=1 // pred_region
      %26 = vsyncadd [#allocation6], 0
      %s27 = sshll.u32 %s1, 4
      %s28 = int_to_ptr.hbm [resolvable:$true] %s27
      %s29 = sshll.u32 [#allocation5], 4
      %s30 = int_to_ptr.vmem [resolvable:$true] %s29
      %35 = dma.hbm_to_vmem [thread:$0]  %s28, 1024, %s30, [#allocation6], 128, 128, 8
    $region9: #{tpu_custom_call.1} parent=1 // pred_fallthru
      _
    // Predicated region
    $region10: #{tpu_custom_call.1} parent=1 // pred_check
      _
    $region11: #{tpu_custom_call.1} parent=1 // pred_check_branch
      %37 = sbr.rel (0) target = $region13
    $region12: #{tpu_custom_call.1} parent=1 // pred_region
      %39 = dma.done [#allocation3], 1024
    $region13: #{tpu_custom_call.1} parent=1 // pred_fallthru
      _
    // Predicated region
    $region14: #{tpu_custom_call.1} parent=1 // pred_check
      _
    $region15: #{tpu_custom_call.1} parent=1 // pred_check_branch
      %41 = sbr.rel (0) target = $region17
    $region16: #{tpu_custom_call.1} parent=1 // pred_region
      %43 = dma.done [#allocation6], 1024
    $region17: #{tpu_custom_call.1} parent=1 // pred_fallthru
      _
    %v44 = vld [vmem:[#allocation2] sm:$0xff]
    %v45 = vld [vmem:[#allocation2 + $0x8] sm:$0xff]
    %v46 = vld [vmem:[#allocation2 + $0x10] sm:$0xff]
    %v47 = vld [vmem:[#allocation2 + $0x18] sm:$0xff]
    %s48 = scalar_lea.vmem [#allocation2], 32
    %v49 = vld [vmem:[%s48] sm:$0xff]
    %v50 = vld [vmem:[%s48 + $0x8] sm:$0xff]
    %v51 = vld [vmem:[%s48 + $0x10] sm:$0xff]
    %v52 = vld [vmem:[%s48 + $0x18] sm:$0xff]
    %v53 = vld [vmem:[#allocation5] sm:$0xff]
    %v54 = vld [vmem:[#allocation5 + $0x8] sm:$0xff]
    %v55 = vld [vmem:[#allocation5 + $0x10] sm:$0xff]
    %v56 = vld [vmem:[#allocation5 + $0x18] sm:$0xff]
    %s57 = scalar_lea.vmem [#allocation5], 32
    %v58 = vld [vmem:[%s57] sm:$0xff]
    %v59 = vld [vmem:[%s57 + $0x8] sm:$0xff]
    %v60 = vld [vmem:[%s57 + $0x10] sm:$0xff]
    %v61 = vld [vmem:[%s57 + $0x18] sm:$0xff]
    %vm62 = vcmask 130048
    %v64 = vsel %vm62, %v44, 0
    %v67 = vsel %vm62, %v45, 0
    %69 = vmatpush.xpose.msra.mxu0 0.0
    %70 = vmatpush.xpose.msra.mxu0 0.0
    %71 = vmatpush.xpose.msra.mxu0 0.0
    %72 = vmatpush.xpose.msra.mxu0 0.0
    %73 = vmatpush.xpose.msra.mxu0 0.0
    %74 = vmatpush.xpose.msra.mxu0 0.0
    %75 = vmatpush.xpose.msra.mxu0 0.0
    %76 = vmatpush.xpose.msra.mxu0 0.0
    %77 = vmatpush.xpose.msra.mxu0 0.0
    %78 = vmatpush.xpose.msra.mxu0 0.0
    %79 = vmatpush.xpose.msra.mxu0 0.0
    %80 = vmatpush.xpose.msra.mxu0 0.0
    %81 = vmatpush.xpose.msra.mxu0 0.0
    %82 = vmatpush.xpose.msra.mxu0 0.0
    %83 = vmatpush.xpose.msra.mxu0 %v67
    %84 = vmatpush.xpose.msra.mxu0 %v64
    %85 = vmatmul.f32.gmra.mxu0 %v64
    %v86 = vpop.f32.mrf.mxu0
    %v87 = vadd.f32 0.0, %v86
    %88 = vmatmul.f32.gmra.mxu0 %v67
    %v89 = vpop.f32.mrf.mxu0
    %v90 = vadd.f32 0.0, %v89
    %91 = vdwg.mxu0
    %v93 = vsel %vm62, %v46, 0
    %v96 = vsel %vm62, %v47, 0
    %98 = vmatpush.xpose.msra.mxu0 0.0
    %99 = vmatpush.xpose.msra.mxu0 0.0
    %100 = vmatpush.xpose.msra.mxu0 0.0
    %101 = vmatpush.xpose.msra.mxu0 0.0
    %102 = vmatpush.xpose.msra.mxu0 0.0
    %103 = vmatpush.xpose.msra.mxu0 0.0
    %104 = vmatpush.xpose.msra.mxu0 0.0
    %105 = vmatpush.xpose.msra.mxu0 0.0
    %106 = vmatpush.xpose.msra.mxu0 0.0
    %107 = vmatpush.xpose.msra.mxu0 0.0
    %108 = vmatpush.xpose.msra.mxu0 0.0
    %109 = vmatpush.xpose.msra.mxu0 0.0
    %110 = vmatpush.xpose.msra.mxu0 0.0
    %111 = vmatpush.xpose.msra.mxu0 0.0
    %112 = vmatpush.xpose.msra.mxu0 %v96
    %113 = vmatpush.xpose.msra.mxu0 %v93
    %114 = vmatmul.f32.gmra.mxu0 %v93
    %v115 = vpop.f32.mrf.mxu0
    %v116 = vadd.f32 0.0, %v115
    %117 = vmatmul.f32.gmra.mxu0 %v96
    %v118 = vpop.f32.mrf.mxu0
    %v119 = vadd.f32 0.0, %v118
    %120 = vdwg.mxu0
    %v122 = vsel %vm62, %v49, 0
    %v125 = vsel %vm62, %v50, 0
    %127 = vmatpush.xpose.msra.mxu0 0.0
    %128 = vmatpush.xpose.msra.mxu0 0.0
    %129 = vmatpush.xpose.msra.mxu0 0.0
    %130 = vmatpush.xpose.msra.mxu0 0.0
    %131 = vmatpush.xpose.msra.mxu0 0.0
    %132 = vmatpush.xpose.msra.mxu0 0.0
    %133 = vmatpush.xpose.msra.mxu0 0.0
    %134 = vmatpush.xpose.msra.mxu0 0.0
    %135 = vmatpush.xpose.msra.mxu0 0.0
    %136 = vmatpush.xpose.msra.mxu0 0.0
    %137 = vmatpush.xpose.msra.mxu0 0.0
    %138 = vmatpush.xpose.msra.mxu0 0.0
    %139 = vmatpush.xpose.msra.mxu0 0.0
    %140 = vmatpush.xpose.msra.mxu0 0.0
    %141 = vmatpush.xpose.msra.mxu0 %v125
    %142 = vmatpush.xpose.msra.mxu0 %v122
    %143 = vmatmul.f32.gmra.mxu0 %v122
    %v144 = vpop.f32.mrf.mxu0
    %v145 = vadd.f32 0.0, %v144
    %146 = vmatmul.f32.gmra.mxu0 %v125
    %v147 = vpop.f32.mrf.mxu0
    %v148 = vadd.f32 0.0, %v147
    %149 = vdwg.mxu0
    %v151 = vsel %vm62, %v51, 0
    %v154 = vsel %vm62, %v52, 0
    %156 = vmatpush.xpose.msra.mxu0 0.0
    %157 = vmatpush.xpose.msra.mxu0 0.0
    %158 = vmatpush.xpose.msra.mxu0 0.0
    %159 = vmatpush.xpose.msra.mxu0 0.0
    %160 = vmatpush.xpose.msra.mxu0 0.0
    %161 = vmatpush.xpose.msra.mxu0 0.0
    %162 = vmatpush.xpose.msra.mxu0 0.0
    %163 = vmatpush.xpose.msra.mxu0 0.0
    %164 = vmatpush.xpose.msra.mxu0 0.0
    %165 = vmatpush.xpose.msra.mxu0 0.0
    %166 = vmatpush.xpose.msra.mxu0 0.0
    %167 = vmatpush.xpose.msra.mxu0 0.0
    %168 = vmatpush.xpose.msra.mxu0 0.0
    %169 = vmatpush.xpose.msra.mxu0 0.0
    %170 = vmatpush.xpose.msra.mxu0 %v154
    %171 = vmatpush.xpose.msra.mxu0 %v151
    %172 = vmatmul.f32.gmra.mxu0 %v151
    %v173 = vpop.f32.mrf.mxu0
    %v174 = vadd.f32 0.0, %v173
    %175 = vmatmul.f32.gmra.mxu0 %v154
    %v176 = vpop.f32.mrf.mxu0
    %v177 = vadd.f32 0.0, %v176
    %178 = vdwg.mxu0
    %v179 = vadd.f32 %v44, %v49
    %v180 = vadd.f32 %v45, %v50
    %v181 = vadd.f32 %v46, %v51
    %v182 = vadd.f32 %v47, %v52
    %v183 = vsub.f32 %v44, %v49
    %v184 = vsub.f32 %v45, %v50
    %v185 = vsub.f32 %v46, %v51
    %v186 = vsub.f32 %v47, %v52
    %v188 = vsel %vm62, %v179, 0
    %v191 = vsel %vm62, %v180, 0
    %v194 = vsel %vm62, %v183, 0
    %v197 = vsel %vm62, %v184, 0
    %199 = vmatpush.xpose.msra.mxu0 0.0
    %200 = vmatpush.xpose.msra.mxu0 0.0
    %201 = vmatpush.xpose.msra.mxu0 0.0
    %202 = vmatpush.xpose.msra.mxu0 0.0
    %203 = vmatpush.xpose.msra.mxu0 0.0
    %204 = vmatpush.xpose.msra.mxu0 0.0
    %205 = vmatpush.xpose.msra.mxu0 0.0
    %206 = vmatpush.xpose.msra.mxu0 0.0
    %207 = vmatpush.xpose.msra.mxu0 0.0
    %208 = vmatpush.xpose.msra.mxu0 0.0
    %209 = vmatpush.xpose.msra.mxu0 0.0
    %210 = vmatpush.xpose.msra.mxu0 0.0
    %211 = vmatpush.xpose.msra.mxu0 0.0
    %212 = vmatpush.xpose.msra.mxu0 0.0
    %213 = vmatpush.xpose.msra.mxu0 %v197
    %214 = vmatpush.xpose.msra.mxu0 %v194
    %215 = vmatmul.f32.gmra.mxu0 %v188
    %v216 = vpop.f32.mrf.mxu0
    %v217 = vadd.f32 0.0, %v216
    %218 = vmatmul.f32.gmra.mxu0 %v191
    %v219 = vpop.f32.mrf.mxu0
    %v220 = vadd.f32 0.0, %v219
    %221 = vdwg.mxu0
    %v223 = vsel %vm62, %v181, 0
    %v226 = vsel %vm62, %v182, 0
    %v229 = vsel %vm62, %v185, 0
    %v232 = vsel %vm62, %v186, 0
    %234 = vmatpush.xpose.msra.mxu0 0.0
    %235 = vmatpush.xpose.msra.mxu0 0.0
    %236 = vmatpush.xpose.msra.mxu0 0.0
    %237 = vmatpush.xpose.msra.mxu0 0.0
    %238 = vmatpush.xpose.msra.mxu0 0.0
    %239 = vmatpush.xpose.msra.mxu0 0.0
    %240 = vmatpush.xpose.msra.mxu0 0.0
    %241 = vmatpush.xpose.msra.mxu0 0.0
    %242 = vmatpush.xpose.msra.mxu0 0.0
    %243 = vmatpush.xpose.msra.mxu0 0.0
    %244 = vmatpush.xpose.msra.mxu0 0.0
    %245 = vmatpush.xpose.msra.mxu0 0.0
    %246 = vmatpush.xpose.msra.mxu0 0.0
    %247 = vmatpush.xpose.msra.mxu0 0.0
    %248 = vmatpush.xpose.msra.mxu0 %v232
    %249 = vmatpush.xpose.msra.mxu0 %v229
    %250 = vmatmul.f32.gmra.mxu0 %v223
    %v251 = vpop.f32.mrf.mxu0
    %v252 = vadd.f32 0.0, %v251
    %253 = vmatmul.f32.gmra.mxu0 %v226
    %v254 = vpop.f32.mrf.mxu0
    %v255 = vadd.f32 0.0, %v254
    %256 = vdwg.mxu0
    %v257 = vadd.f32 %v87, %v145
    %v258 = vadd.f32 %v90, %v148
    %v259 = vadd.f32 %v116, %v174
    %v260 = vadd.f32 %v119, %v177
    %v261 = vsub.f32 %v217, %v87
    %v262 = vsub.f32 %v220, %v90
    %v263 = vsub.f32 %v252, %v116
    %v264 = vsub.f32 %v255, %v119
    %v265 = vadd.f32 %v261, %v145
    %v266 = vadd.f32 %v262, %v148
    %v267 = vadd.f32 %v263, %v174
    %v268 = vadd.f32 %v264, %v177
    %v270 = vsel %vm62, %v257, 0
    %v273 = vsel %vm62, %v258, 0
    %275 = vmatpush.msra.mxu0 0.0
    %276 = vmatpush.msra.mxu0 0.0
    %277 = vmatpush.msra.mxu0 0.0
    %278 = vmatpush.msra.mxu0 0.0
    %279 = vmatpush.msra.mxu0 0.0
    %280 = vmatpush.msra.mxu0 0.0
    %281 = vmatpush.msra.mxu0 0.0
    %282 = vmatpush.msra.mxu0 0.0
    %283 = vmatpush.msra.mxu0 0.0
    %284 = vmatpush.msra.mxu0 0.0
    %285 = vmatpush.msra.mxu0 0.0
    %286 = vmatpush.msra.mxu0 0.0
    %287 = vmatpush.msra.mxu0 0.0
    %288 = vmatpush.msra.mxu0 0.0
    %289 = vmatpush.msra.mxu0 %v54
    %290 = vmatpush.msra.mxu0 %v53
    %291 = vmatmul.f32.gmra.mxu0 %v270
    %v292 = vpop.f32.mrf.mxu0
    %v293 = vadd.f32 0.0, %v292
    %294 = vmatmul.f32.gmra.mxu0 %v273
    %v295 = vpop.f32.mrf.mxu0
    %v296 = vadd.f32 0.0, %v295
    %297 = vdwg.mxu0
    %v299 = vsel %vm62, %v259, 0
    %v302 = vsel %vm62, %v260, 0
    %304 = vmatpush.msra.mxu0 0.0
    %305 = vmatpush.msra.mxu0 0.0
    %306 = vmatpush.msra.mxu0 0.0
    %307 = vmatpush.msra.mxu0 0.0
    %308 = vmatpush.msra.mxu0 0.0
    %309 = vmatpush.msra.mxu0 0.0
    %310 = vmatpush.msra.mxu0 0.0
    %311 = vmatpush.msra.mxu0 0.0
    %312 = vmatpush.msra.mxu0 0.0
    %313 = vmatpush.msra.mxu0 0.0
    %314 = vmatpush.msra.mxu0 0.0
    %315 = vmatpush.msra.mxu0 0.0
    %316 = vmatpush.msra.mxu0 0.0
    %317 = vmatpush.msra.mxu0 0.0
    %318 = vmatpush.msra.mxu0 %v56
    %319 = vmatpush.msra.mxu0 %v55
    %320 = vmatmul.f32.gmra.mxu0 %v299
    %v321 = vpop.f32.mrf.mxu0
    %v322 = vadd.f32 0.0, %v321
    %323 = vmatmul.f32.gmra.mxu0 %v302
    %v324 = vpop.f32.mrf.mxu0
    %v325 = vadd.f32 0.0, %v324
    %326 = vdwg.mxu0
    %v328 = vsel %vm62, %v265, 0
    %v331 = vsel %vm62, %v266, 0
    %333 = vmatpush.msra.mxu0 0.0
    %334 = vmatpush.msra.mxu0 0.0
    %335 = vmatpush.msra.mxu0 0.0
    %336 = vmatpush.msra.mxu0 0.0
    %337 = vmatpush.msra.mxu0 0.0
    %338 = vmatpush.msra.mxu0 0.0
    %339 = vmatpush.msra.mxu0 0.0
    %340 = vmatpush.msra.mxu0 0.0
    %341 = vmatpush.msra.mxu0 0.0
    %342 = vmatpush.msra.mxu0 0.0
    %343 = vmatpush.msra.mxu0 0.0
    %344 = vmatpush.msra.mxu0 0.0
    %345 = vmatpush.msra.mxu0 0.0
    %346 = vmatpush.msra.mxu0 0.0
    %347 = vmatpush.msra.mxu0 %v59
    %348 = vmatpush.msra.mxu0 %v58
    %349 = vmatmul.f32.gmra.mxu0 %v328
    %v350 = vpop.f32.mrf.mxu0
    %v351 = vadd.f32 0.0, %v350
    %352 = vmatmul.f32.gmra.mxu0 %v331
    %v353 = vpop.f32.mrf.mxu0
    %v354 = vadd.f32 0.0, %v353
    %355 = vdwg.mxu0
    %v357 = vsel %vm62, %v267, 0
    %v360 = vsel %vm62, %v268, 0
    %362 = vmatpush.msra.mxu0 0.0
    %363 = vmatpush.msra.mxu0 0.0
    %364 = vmatpush.msra.mxu0 0.0
    %365 = vmatpush.msra.mxu0 0.0
    %366 = vmatpush.msra.mxu0 0.0
    %367 = vmatpush.msra.mxu0 0.0
    %368 = vmatpush.msra.mxu0 0.0
    %369 = vmatpush.msra.mxu0 0.0
    %370 = vmatpush.msra.mxu0 0.0
    %371 = vmatpush.msra.mxu0 0.0
    %372 = vmatpush.msra.mxu0 0.0
    %373 = vmatpush.msra.mxu0 0.0
    %374 = vmatpush.msra.mxu0 0.0
    %375 = vmatpush.msra.mxu0 0.0
    %376 = vmatpush.msra.mxu0 %v61
    %377 = vmatpush.msra.mxu0 %v60
    %378 = vmatmul.f32.gmra.mxu0 %v357
    %v379 = vpop.f32.mrf.mxu0
    %v380 = vadd.f32 0.0, %v379
    %381 = vmatmul.f32.gmra.mxu0 %v360
    %v382 = vpop.f32.mrf.mxu0
    %v383 = vadd.f32 0.0, %v382
    %384 = vdwg.mxu0
    %v385 = vadd.f32 %v257, %v265
    %v386 = vadd.f32 %v258, %v266
    %v387 = vadd.f32 %v259, %v267
    %v388 = vadd.f32 %v260, %v268
    %v389 = vadd.f32 %v53, %v58
    %v390 = vadd.f32 %v54, %v59
    %v391 = vadd.f32 %v55, %v60
    %v392 = vadd.f32 %v56, %v61
    %v394 = vsel %vm62, %v385, 0
    %v397 = vsel %vm62, %v386, 0
    %399 = vmatpush.msra.mxu0 0.0
    %400 = vmatpush.msra.mxu0 0.0
    %401 = vmatpush.msra.mxu0 0.0
    %402 = vmatpush.msra.mxu0 0.0
    %403 = vmatpush.msra.mxu0 0.0
    %404 = vmatpush.msra.mxu0 0.0
    %405 = vmatpush.msra.mxu0 0.0
    %406 = vmatpush.msra.mxu0 0.0
    %407 = vmatpush.msra.mxu0 0.0
    %408 = vmatpush.msra.mxu0 0.0
    %409 = vmatpush.msra.mxu0 0.0
    %410 = vmatpush.msra.mxu0 0.0
    %411 = vmatpush.msra.mxu0 0.0
    %412 = vmatpush.msra.mxu0 0.0
    %413 = vmatpush.msra.mxu0 %v390
    %414 = vmatpush.msra.mxu0 %v389
    %415 = vmatmul.f32.gmra.mxu0 %v394
    %v416 = vpop.f32.mrf.mxu0
    %v417 = vadd.f32 0.0, %v416
    %418 = vmatmul.f32.gmra.mxu0 %v397
    %v419 = vpop.f32.mrf.mxu0
    %v420 = vadd.f32 0.0, %v419
    %421 = vdwg.mxu0
    %v423 = vsel %vm62, %v387, 0
    %v426 = vsel %vm62, %v388, 0
    %428 = vmatpush.msra.mxu0 0.0
    %429 = vmatpush.msra.mxu0 0.0
    %430 = vmatpush.msra.mxu0 0.0
    %431 = vmatpush.msra.mxu0 0.0
    %432 = vmatpush.msra.mxu0 0.0
    %433 = vmatpush.msra.mxu0 0.0
    %434 = vmatpush.msra.mxu0 0.0
    %435 = vmatpush.msra.mxu0 0.0
    %436 = vmatpush.msra.mxu0 0.0
    %437 = vmatpush.msra.mxu0 0.0
    %438 = vmatpush.msra.mxu0 0.0
    %439 = vmatpush.msra.mxu0 0.0
    %440 = vmatpush.msra.mxu0 0.0
    %441 = vmatpush.msra.mxu0 0.0
    %442 = vmatpush.msra.mxu0 %v392
    %443 = vmatpush.msra.mxu0 %v391
    %444 = vmatmul.f32.gmra.mxu0 %v423
    %v445 = vpop.f32.mrf.mxu0
    %v446 = vadd.f32 0.0, %v445
    %447 = vmatmul.f32.gmra.mxu0 %v426
    %v448 = vpop.f32.mrf.mxu0
    %v449 = vadd.f32 0.0, %v448
    %450 = vdwg.mxu0
    %v451 = vsub.f32 %v293, %v351
    %v452 = vsub.f32 %v296, %v354
    %v453 = vsub.f32 %v322, %v380
    %v454 = vsub.f32 %v325, %v383
    %455 = vst.msk [vmem:[#allocation7] sm:$0xff] %vm62, %v451
    %456 = vst.msk [vmem:[#allocation7 + $0x8] sm:$0xff] %vm62, %v452
    %457 = vst.msk [vmem:[#allocation7 + $0x10] sm:$0xff] %vm62, %v453
    %458 = vst.msk [vmem:[#allocation7 + $0x18] sm:$0xff] %vm62, %v454
    %v459 = vsub.f32 %v417, %v293
    %v460 = vsub.f32 %v420, %v296
    %v461 = vsub.f32 %v446, %v322
    %v462 = vsub.f32 %v449, %v325
    %v463 = vsub.f32 %v459, %v351
    %v464 = vsub.f32 %v460, %v354
    %v465 = vsub.f32 %v461, %v380
    %v466 = vsub.f32 %v462, %v383
    %s467 = scalar_lea.vmem [#allocation7], 32
    %468 = vst.msk [vmem:[%s467] sm:$0xff] %vm62, %v463
    %469 = vst.msk [vmem:[%s467 + $0x8] sm:$0xff] %vm62, %v464
    %470 = vst.msk [vmem:[%s467 + $0x10] sm:$0xff] %vm62, %v465
    %471 = vst.msk [vmem:[%s467 + $0x18] sm:$0xff] %vm62, %v466
    // Predicated region
    $region18: #{tpu_custom_call.1} parent=1 // pred_check
      _
    $region19: #{tpu_custom_call.1} parent=1 // pred_check_branch
      %473 = sbr.rel (0) target = $region21
    $region20: #{tpu_custom_call.1} parent=1 // pred_region
      %475 = vsyncadd [#allocation4], 0
      %s476 = sshll.u32 [#allocation7], 4
      %s477 = int_to_ptr.vmem [resolvable:$true] %s476
      %s478 = sshll.u32 %s2, 4
      %s479 = int_to_ptr.hbm [resolvable:$true] %s478
      %484 = dma.vmem_to_hbm [thread:$0]  %s477, 1024, %s479, [#allocation4], 128, 128, 8
    $region21: #{tpu_custom_call.1} parent=1 // pred_fallthru
      _
    // Predicated region
    $region22: #{tpu_custom_call.1} parent=1 // pred_check
      _
    $region23: #{tpu_custom_call.1} parent=1 // pred_check_branch
      %486 = sbr.rel (0) target = $region25
    $region24: #{tpu_custom_call.1} parent=1 // pred_region
      %488 = dma.done [#allocation4], 1024
    $region25: #{tpu_custom_call.1} parent=1 // pred_fallthru
      _
    %489 = vsyncpa [#allocation3], 1
    %490 = vsyncpa [#allocation6], 1
    %491 = vsyncpa [#allocation4], 1

</llo_original>
